<compile_context>
chip_gen: v6e
topology: v6e:2x2x1
jax: 0.10.0
libtpu: 0.0.40
codegen_flags: <defaults>
</compile_context>

<pallas_src>
import math

import jax
import jax.numpy as jnp
from jax.experimental import pallas as pl
from jax.experimental.pallas import tpu as pltpu


def _stream_net_kernel(x_ref, *refs):
    """Fused chain: out = (((x @ W1) @ W2) ... ) @ W6, all weights in (K, N) layout."""
    *w_refs, o_ref = refs
    h = x_ref[...]
    for w_ref in w_refs:
        h = jnp.dot(h, w_ref[...], preferred_element_type=jnp.float32)
    o_ref[...] = h.astype(o_ref.dtype)


def stream_net_forward(x: jax.Array, weights_out_in, *, tm: int = 256,
                       vmem_limit_bytes: int = 48 * 1024 * 1024) -> jax.Array:
    """Forward pass of stream_Net.

    Args:
      x: (M, in_features) input batch.
      weights_out_in: list of 6 weight matrices in torch layout (out_f, in_f).
    Returns:
      (M, out_features) output, equal to x @ W1.T @ ... @ W6.T.
    """
    assert x.ndim == 2
    # Transpose once (layout plumbing outside the kernel) so the kernel does a
    # plain (M,K) @ (K,N) contraction on the MXU.
    weights_kn = [w.T for w in weights_out_in]
    M, K0 = x.shape
    assert K0 == weights_kn[0].shape[0], "in_features mismatch"
    n_out = weights_kn[-1].shape[1]

    # Tile only the batch/M axis; pad M up to a tile multiple if needed.
    if M <= tm:
        tm_eff, m_pad = M, M
        xp = x
    else:
        tm_eff = tm
        m_pad = ((M + tm - 1) // tm) * tm
        xp = jnp.pad(x, ((0, m_pad - M), (0, 0)))

    grid = (m_pad // tm_eff,)

    in_specs = [pl.BlockSpec((tm_eff, K0), lambda i: (i, 0))]
    for w in weights_kn:
        k, n = w.shape
        in_specs.append(pl.BlockSpec((k, n), lambda i: (0, 0)))  # resident weight block
    out_specs = pl.BlockSpec((tm_eff, n_out), lambda i: (i, 0))

    itemsize = jnp.dtype(x.dtype).itemsize
    flops = sum(2 * m_pad * w.shape[0] * w.shape[1] for w in weights_kn)
    bytes_accessed = (xp.size * itemsize
                      + sum(w.size * itemsize for w in weights_kn)
                      + m_pad * n_out * itemsize)

    out = pl.pallas_call(
        _stream_net_kernel,
        out_shape=jax.ShapeDtypeStruct((m_pad, n_out), x.dtype),
        grid_spec=pltpu.PrefetchScalarGridSpec(
            num_scalar_prefetch=0,
            grid=grid,
            in_specs=in_specs,
            out_specs=out_specs,
        ),
        compiler_params=pltpu.CompilerParams(
            dimension_semantics=("parallel",),
            vmem_limit_bytes=vmem_limit_bytes,
        ),
        cost_estimate=pl.CostEstimate(
            flops=flops, transcendentals=0, bytes_accessed=bytes_accessed),
    )(xp, *weights_kn)

    return out[:M] if m_pad != M else out


if __name__ == "__main__":
    key = jax.random.PRNGKey(0)
    batch, in_features, out_features, hidden = 8, 32, 16, 240

    keys = jax.random.split(key, 7)
    x = jax.random.normal(keys[0], (batch, in_features), dtype=jnp.float32)

    # Build the 6 streamLinear weights in torch (out_f, in_f) layout,
    # kaiming_uniform-like init (bias params exist in the module but are
    # never used in forward, so they are omitted).
    layer_dims = [(in_features, hidden), (hidden, hidden), (hidden, hidden),
                  (hidden, hidden), (hidden, hidden), (hidden, out_features)]
    weights = []
    for i, (fin, fout) in enumerate(layer_dims):
        bound = 1.0 / math.sqrt(fin)
        w = jax.random.uniform(keys[i + 1], (fout, fin), jnp.float32, -bound, bound)
        weights.append(w)

    out = stream_net_forward(x, weights)
    jax.block_until_ready(out)

    # Pure-JAX reference (high precision) for correctness check.
    ref = x
    for w in weights:
        ref = jnp.dot(ref, w.T, precision=jax.lax.Precision.HIGHEST)

    assert out.shape == (batch, out_features)
    assert jnp.allclose(out, ref, atol=1e-3, rtol=1e-3), "mismatch vs reference"

    print("KERNEL_OK")
</pallas_src>

<mosaic_0001>
module attributes {stable_mosaic.version = 11 : i64} {
  func.func @_stream_net_kernel(%arg0: i32, %arg1: memref<8x32xf32, #tpu.memory_space<vmem>>, %arg2: memref<32x240xf32, #tpu.memory_space<vmem>>, %arg3: memref<240x240xf32, #tpu.memory_space<vmem>>, %arg4: memref<240x240xf32, #tpu.memory_space<vmem>>, %arg5: memref<240x240xf32, #tpu.memory_space<vmem>>, %arg6: memref<240x240xf32, #tpu.memory_space<vmem>>, %arg7: memref<240x16xf32, #tpu.memory_space<vmem>>, %arg8: memref<8x16xf32, #tpu.memory_space<vmem>>) attributes {dimension_semantics = [#tpu.dimension_semantics<parallel>], iteration_bounds = array<i64: 1>, scalar_prefetch = 0 : i64, scratch_operands = 0 : i64, tpu.core_type = #tpu.core_type<tc>, window_params = [{transform_indices = @transform_0, window_bounds = array<i64: 8, 32>}, {pipeline_mode = #tpu.pipeline_mode<synchronous>, transform_indices = @transform_1, window_bounds = array<i64: 32, 240>}, {pipeline_mode = #tpu.pipeline_mode<synchronous>, transform_indices = @transform_2, window_bounds = array<i64: 240, 240>}, {pipeline_mode = #tpu.pipeline_mode<synchronous>, transform_indices = @transform_3, window_bounds = array<i64: 240, 240>}, {pipeline_mode = #tpu.pipeline_mode<synchronous>, transform_indices = @transform_4, window_bounds = array<i64: 240, 240>}, {pipeline_mode = #tpu.pipeline_mode<synchronous>, transform_indices = @transform_5, window_bounds = array<i64: 240, 240>}, {pipeline_mode = #tpu.pipeline_mode<synchronous>, transform_indices = @transform_6, window_bounds = array<i64: 240, 16>}, {transform_indices = @transform_7, window_bounds = array<i64: 8, 16>}]} {
    %c0 = arith.constant 0 : index
    %c0_0 = arith.constant 0 : index
    %0 = vector.load %arg1[%c0, %c0_0] : memref<8x32xf32, #tpu.memory_space<vmem>>, vector<8x32xf32>
    %c0_1 = arith.constant 0 : index
    %c0_2 = arith.constant 0 : index
    %1 = vector.load %arg2[%c0_1, %c0_2] : memref<32x240xf32, #tpu.memory_space<vmem>>, vector<32x240xf32>
    %cst = arith.constant dense<0.000000e+00> : vector<8x240xf32>
    %2 = tpu.matmul %0, %1, %cst {dimension_numbers = #tpu.dot_dimension_numbers<[1], [0], [0], [1], [0, 0, 1, 1], [], []>} : vector<8x32xf32>, vector<32x240xf32>, vector<8x240xf32> -> vector<8x240xf32>
    %c0_3 = arith.constant 0 : index
    %c0_4 = arith.constant 0 : index
    %3 = vector.load %arg3[%c0_3, %c0_4] : memref<240x240xf32, #tpu.memory_space<vmem>>, vector<240x240xf32>
    %cst_5 = arith.constant dense<0.000000e+00> : vector<8x240xf32>
    %4 = tpu.matmul %2, %3, %cst_5 {dimension_numbers = #tpu.dot_dimension_numbers<[1], [0], [0], [1], [0, 0, 1, 1], [], []>} : vector<8x240xf32>, vector<240x240xf32>, vector<8x240xf32> -> vector<8x240xf32>
    %c0_6 = arith.constant 0 : index
    %c0_7 = arith.constant 0 : index
    %5 = vector.load %arg4[%c0_6, %c0_7] : memref<240x240xf32, #tpu.memory_space<vmem>>, vector<240x240xf32>
    %cst_8 = arith.constant dense<0.000000e+00> : vector<8x240xf32>
    %6 = tpu.matmul %4, %5, %cst_8 {dimension_numbers = #tpu.dot_dimension_numbers<[1], [0], [0], [1], [0, 0, 1, 1], [], []>} : vector<8x240xf32>, vector<240x240xf32>, vector<8x240xf32> -> vector<8x240xf32>
    %c0_9 = arith.constant 0 : index
    %c0_10 = arith.constant 0 : index
    %7 = vector.load %arg5[%c0_9, %c0_10] : memref<240x240xf32, #tpu.memory_space<vmem>>, vector<240x240xf32>
    %cst_11 = arith.constant dense<0.000000e+00> : vector<8x240xf32>
    %8 = tpu.matmul %6, %7, %cst_11 {dimension_numbers = #tpu.dot_dimension_numbers<[1], [0], [0], [1], [0, 0, 1, 1], [], []>} : vector<8x240xf32>, vector<240x240xf32>, vector<8x240xf32> -> vector<8x240xf32>
    %c0_12 = arith.constant 0 : index
    %c0_13 = arith.constant 0 : index
    %9 = vector.load %arg6[%c0_12, %c0_13] : memref<240x240xf32, #tpu.memory_space<vmem>>, vector<240x240xf32>
    %cst_14 = arith.constant dense<0.000000e+00> : vector<8x240xf32>
    %10 = tpu.matmul %8, %9, %cst_14 {dimension_numbers = #tpu.dot_dimension_numbers<[1], [0], [0], [1], [0, 0, 1, 1], [], []>} : vector<8x240xf32>, vector<240x240xf32>, vector<8x240xf32> -> vector<8x240xf32>
    %c0_15 = arith.constant 0 : index
    %c0_16 = arith.constant 0 : index
    %11 = vector.load %arg7[%c0_15, %c0_16] : memref<240x16xf32, #tpu.memory_space<vmem>>, vector<240x16xf32>
    %cst_17 = arith.constant dense<0.000000e+00> : vector<8x16xf32>
    %12 = tpu.matmul %10, %11, %cst_17 {dimension_numbers = #tpu.dot_dimension_numbers<[1], [0], [0], [1], [0, 0, 1, 1], [], []>} : vector<8x240xf32>, vector<240x16xf32>, vector<8x16xf32> -> vector<8x16xf32>
    %c0_18 = arith.constant 0 : index
    %c0_19 = arith.constant 0 : index
    %13 = vector.load %arg8[%c0_18, %c0_19] : memref<8x16xf32, #tpu.memory_space<vmem>>, vector<8x16xf32>
    tpu.vector_store %arg8[%c0_18, %c0_19], %12 {strides = array<i32>} : memref<8x16xf32, #tpu.memory_space<vmem>>, vector<8x16xf32>,
    return
  }
  func.func @transform_0(%arg0: i32) -> (i32, i32) {
    %c0_i32 = arith.constant 0 : i32
    %c0_i32_0 = arith.constant 0 : i32
    return %arg0, %c0_i32 : i32, i32
  }
  func.func @transform_1(%arg0: i32) -> (i32, i32) {
    %c0_i32 = arith.constant 0 : i32
    %c0_i32_0 = arith.constant 0 : i32
    %c0_i32_1 = arith.constant 0 : i32
    return %c0_i32, %c0_i32_0 : i32, i32
  }
  func.func @transform_2(%arg0: i32) -> (i32, i32) {
    %c0_i32 = arith.constant 0 : i32
    %c0_i32_0 = arith.constant 0 : i32
    %c0_i32_1 = arith.constant 0 : i32
    return %c0_i32, %c0_i32_0 : i32, i32
  }
  func.func @transform_3(%arg0: i32) -> (i32, i32) {
    %c0_i32 = arith.constant 0 : i32
    %c0_i32_0 = arith.constant 0 : i32
    %c0_i32_1 = arith.constant 0 : i32
    return %c0_i32, %c0_i32_0 : i32, i32
  }
  func.func @transform_4(%arg0: i32) -> (i32, i32) {
    %c0_i32 = arith.constant 0 : i32
    %c0_i32_0 = arith.constant 0 : i32
    %c0_i32_1 = arith.constant 0 : i32
    return %c0_i32, %c0_i32_0 : i32, i32
  }
  func.func @transform_5(%arg0: i32) -> (i32, i32) {
    %c0_i32 = arith.constant 0 : i32
    %c0_i32_0 = arith.constant 0 : i32
    %c0_i32_1 = arith.constant 0 : i32
    return %c0_i32, %c0_i32_0 : i32, i32
  }
  func.func @transform_6(%arg0: i32) -> (i32, i32) {
    %c0_i32 = arith.constant 0 : i32
    %c0_i32_0 = arith.constant 0 : i32
    %c0_i32_1 = arith.constant 0 : i32
    return %c0_i32, %c0_i32_0 : i32, i32
  }
  func.func @transform_7(%arg0: i32) -> (i32, i32) {
    %c0_i32 = arith.constant 0 : i32
    %c0_i32_0 = arith.constant 0 : i32
    return %arg0, %c0_i32 : i32, i32
  }
}

</mosaic_0001>

<llo_original>
// kernel: tpu_custom_call.1
$region0: #{tpu_custom_call.1}
  #allocation0 [shape = 'u32[]', space=smem, size = 0x4, offset = 0x4, fixed_abs, tag = 'smem constant byte address 0x4 - core index']
  #allocation1 [shape = 'u32[144,128]{1,0:T(1,128)}', space=vmem, size = 0x12000, scoped, tag = 'internal scratch']
  %s0 = inlined_call_operand.vmem [shape: f32[8,32], index: 0, kind: input, shape index: {}]
  %s1 = inlined_call_operand.vmem [shape: f32[32,240], index: 1, kind: input, shape index: {}]
  %s2 = inlined_call_operand.hbm [shape: f32[240,240], index: 2, kind: input, shape index: {}]
  %s3 = inlined_call_operand.hbm [shape: f32[240,240], index: 3, kind: input, shape index: {}]
  %s4 = inlined_call_operand.hbm [shape: f32[240,240], index: 4, kind: input, shape index: {}]
  %s5 = inlined_call_operand.hbm [shape: f32[240,240], index: 5, kind: input, shape index: {}]
  %s6 = inlined_call_operand.vmem [shape: f32[240,16], index: 6, kind: input, shape index: {}]
  %s7 = inlined_call_operand.hbm [shape: f32[8,16], index: 7, kind: output, shape index: {}]
  %s8 = sld [smem:[#allocation0]]
  $region54: #{tpu_custom_call.1} parent=0
    _
  %s10 = ssub.s32 1, %s8
  %s11 = scalar_select 0, %s10, %s8
  $region1: #{tpu_custom_call.1} parent=0
    #allocation2 [shape = 'u8[245760]{0}', space=vmem, size = 0x3c000, scoped, tag = 'input window, operand 2, single buffered']
    #allocation3 [shape = 's32[1]{0}', space=sflag, size = 0x4, scoped, tag = 'scoped memory for tpu_custom_call.1']
    #allocation4 [shape = 's32[1]{0}', space=sflag, size = 0x4, scoped, tag = 'scoped memory for tpu_custom_call.1']
    #allocation5 [shape = 'u8[245760]{0}', space=vmem, size = 0x3c000, scoped, tag = 'input window, operand 3, single buffered']
    #allocation6 [shape = 's32[1]{0}', space=sflag, size = 0x4, scoped, tag = 'scoped memory for tpu_custom_call.1']
    #allocation7 [shape = 'u8[245760]{0}', space=vmem, size = 0x3c000, scoped, tag = 'input window, operand 4, single buffered']
    #allocation8 [shape = 'u8[245760]{0}', space=vmem, size = 0x3c000, scoped, tag = 'input window, operand 5, single buffered']
    #allocation9 [shape = 's32[1]{0}', space=sflag, size = 0x4, scoped, tag = 'scoped memory for tpu_custom_call.1']
    #allocation10 [shape = 'u8[4096]{0}', space=vmem, size = 0x1000, scoped, tag = 'output window, operand 0, single buffered']
    %12 = vsyncpa [#allocation3], 0
    %13 = vsyncpa [#allocation6], 0
    %14 = vsyncpa [#allocation9], 0
    %15 = vsyncpa [#allocation4], 0
    // Predicated region
    $region2: #{tpu_custom_call.1} parent=1 // pred_check
      _
    $region3: #{tpu_custom_call.1} parent=1 // pred_check_branch
      %17 = sbr.rel (0) target = $region5
    $region4: #{tpu_custom_call.1} parent=1 // pred_region
      _
    $region5: #{tpu_custom_call.1} parent=1 // pred_fallthru
      _
    // Predicated region
    $region6: #{tpu_custom_call.1} parent=1 // pred_check
      _
    $region7: #{tpu_custom_call.1} parent=1 // pred_check_branch
      %19 = sbr.rel (0) target = $region9
    $region8: #{tpu_custom_call.1} parent=1 // pred_region
      _
    $region9: #{tpu_custom_call.1} parent=1 // pred_fallthru
      _
    // Predicated region
    $region10: #{tpu_custom_call.1} parent=1 // pred_check
      _
    $region11: #{tpu_custom_call.1} parent=1 // pred_check_branch
      %21 = sbr.rel (0) target = $region13
    $region12: #{tpu_custom_call.1} parent=1 // pred_region
      %s23 = ssub.s32 7680, 7680
      %24 = vsyncadd [#allocation3], %s23
      %s25 = sshll.u32 [#allocation2], 4
      %s26 = int_to_ptr.vmem [resolvable:$true] %s25
      %31 = dma.hbm_to_vmem [thread:$0]  %s2, 7680, %s26, [#allocation3], 256, 256, 16
    $region13: #{tpu_custom_call.1} parent=1 // pred_fallthru
      _
    // Predicated region
    $region14: #{tpu_custom_call.1} parent=1 // pred_check
      _
    $region15: #{tpu_custom_call.1} parent=1 // pred_check_branch
      %33 = sbr.rel (0) target = $region17
    $region16: #{tpu_custom_call.1} parent=1 // pred_region
      %s35 = ssub.s32 7680, 7680
      %36 = vsyncadd [#allocation6], %s35
      %s37 = sshll.u32 [#allocation5], 4
      %s38 = int_to_ptr.vmem [resolvable:$true] %s37
      %43 = dma.hbm_to_vmem [thread:$0]  %s3, 7680, %s38, [#allocation6], 256, 256, 16
    $region17: #{tpu_custom_call.1} parent=1 // pred_fallthru
      _
    // Predicated region
    $region18: #{tpu_custom_call.1} parent=1 // pred_check
      _
    $region19: #{tpu_custom_call.1} parent=1 // pred_check_branch
      %45 = sbr.rel (0) target = $region21
    $region20: #{tpu_custom_call.1} parent=1 // pred_region
      %s47 = ssub.s32 7680, 7680
      %48 = vsyncadd [#allocation6], %s47
      %s49 = sshll.u32 [#allocation7], 4
      %s50 = int_to_ptr.vmem [resolvable:$true] %s49
      %55 = dma.hbm_to_vmem [thread:$0]  %s4, 7680, %s50, [#allocation6], 256, 256, 16
    $region21: #{tpu_custom_call.1} parent=1 // pred_fallthru
      _
    // Predicated region
    $region22: #{tpu_custom_call.1} parent=1 // pred_check
      _
    $region23: #{tpu_custom_call.1} parent=1 // pred_check_branch
      %57 = sbr.rel (0) target = $region25
    $region24: #{tpu_custom_call.1} parent=1 // pred_region
      %s59 = ssub.s32 7680, 7680
      %60 = vsyncadd [#allocation9], %s59
      %s61 = sshll.u32 [#allocation8], 4
      %s62 = int_to_ptr.vmem [resolvable:$true] %s61
      %67 = dma.hbm_to_vmem [thread:$0]  %s5, 7680, %s62, [#allocation9], 256, 256, 16
    $region25: #{tpu_custom_call.1} parent=1 // pred_fallthru
      _
    // Predicated region
    $region26: #{tpu_custom_call.1} parent=1 // pred_check
      _
    $region27: #{tpu_custom_call.1} parent=1 // pred_check_branch
      %69 = sbr.rel (0) target = $region29
    $region28: #{tpu_custom_call.1} parent=1 // pred_region
      _
    $region29: #{tpu_custom_call.1} parent=1 // pred_fallthru
      _
    // Predicated region
    $region30: #{tpu_custom_call.1} parent=1 // pred_check
      _
    $region31: #{tpu_custom_call.1} parent=1 // pred_check_branch
      %71 = sbr.rel (0) target = $region33
    $region32: #{tpu_custom_call.1} parent=1 // pred_region
      %72 = dma.done [#allocation3], 7680
    $region33: #{tpu_custom_call.1} parent=1 // pred_fallthru
      _
    // Predicated region
    $region34: #{tpu_custom_call.1} parent=1 // pred_check
      _
    $region35: #{tpu_custom_call.1} parent=1 // pred_check_branch
      %74 = sbr.rel (0) target = $region37
    $region36: #{tpu_custom_call.1} parent=1 // pred_region
      %75 = dma.done [#allocation6], 7680
    $region37: #{tpu_custom_call.1} parent=1 // pred_fallthru
      _
    // Predicated region
    $region38: #{tpu_custom_call.1} parent=1 // pred_check
      _
    $region39: #{tpu_custom_call.1} parent=1 // pred_check_branch
      %77 = sbr.rel (0) target = $region41
    $region40: #{tpu_custom_call.1} parent=1 // pred_region
      %78 = dma.done [#allocation6], 7680
    $region41: #{tpu_custom_call.1} parent=1 // pred_fallthru
      _
    // Predicated region
    $region42: #{tpu_custom_call.1} parent=1 // pred_check
      _
    $region43: #{tpu_custom_call.1} parent=1 // pred_check_branch
      %80 = sbr.rel (0) target = $region45
    $region44: #{tpu_custom_call.1} parent=1 // pred_region
      %81 = dma.done [#allocation9], 7680
    $region45: #{tpu_custom_call.1} parent=1 // pred_fallthru
      _
    %v82 = vld [vmem:[%s0] sm:$0xff]
    %v83 = vld [vmem:[%s1] sm:$0xff]
    %v84 = vld [vmem:[%s1 + $0x8] sm:$0xff]
    %v85 = vld [vmem:[%s1 + $0x10] sm:$0xff]
    %v86 = vld [vmem:[%s1 + $0x18] sm:$0xff]
    %v87 = vld [vmem:[%s1 + $0x20] sm:$0xff]
    %v88 = vld [vmem:[%s1 + $0x28] sm:$0xff]
    %v89 = vld [vmem:[%s1 + $0x30] sm:$0xff]
    %v90 = vld [vmem:[%s1 + $0x38] sm:$0xff]
    %vm91 = vcmask 261120
    %v93 = vsel %vm91, %v82, 0
    %95 = vmatprep.subr.mxu0 0.0
    %96 = vmatpush1.msra.mxu0 0.0
    %97 = vmatprep.subr.mxu0 0.0
    %98 = vmatpush1.msra.mxu0 0.0
    %99 = vmatprep.subr.mxu0 0.0
    %100 = vmatpush1.msra.mxu0 0.0
    %101 = vmatprep.subr.mxu0 0.0
    %102 = vmatpush1.msra.mxu0 0.0
    %103 = vmatprep.subr.mxu0 0.0
    %104 = vmatpush1.msra.mxu0 0.0
    %105 = vmatprep.subr.mxu0 0.0
    %106 = vmatpush1.msra.mxu0 0.0
    %107 = vmatprep.subr.mxu0 0.0
    %108 = vmatpush1.msra.mxu0 0.0
    %109 = vmatprep.subr.mxu0 0.0
    %110 = vmatpush1.msra.mxu0 0.0
    %111 = vmatprep.subr.mxu0 0.0
    %112 = vmatpush1.msra.mxu0 0.0
    %113 = vmatprep.subr.mxu0 0.0
    %114 = vmatpush1.msra.mxu0 0.0
    %115 = vmatprep.subr.mxu0 0.0
    %116 = vmatpush1.msra.mxu0 0.0
    %117 = vmatprep.subr.mxu0 0.0
    %118 = vmatpush1.msra.mxu0 0.0
    %119 = vmatprep.subr.mxu0 %v90
    %120 = vmatpush1.msra.mxu0 %v89
    %121 = vmatprep.subr.mxu0 %v88
    %122 = vmatpush1.msra.mxu0 %v87
    %123 = vmatprep.subr.mxu0 %v86
    %124 = vmatpush1.msra.mxu0 %v85
    %125 = vmatprep.subr.mxu0 %v84
    %126 = vmatpush1.msra.mxu0 %v83
    %127 = vmatprep.subr.mxu0 0.0
    %128 = vmatpush2.msra.mxu0 0.0
    %129 = vmatprep.subr.mxu0 0.0
    %130 = vmatpush2.msra.mxu0 0.0
    %131 = vmatprep.subr.mxu0 0.0
    %132 = vmatpush2.msra.mxu0 0.0
    %133 = vmatprep.subr.mxu0 0.0
    %134 = vmatpush2.msra.mxu0 0.0
    %135 = vmatprep.subr.mxu0 0.0
    %136 = vmatpush2.msra.mxu0 0.0
    %137 = vmatprep.subr.mxu0 0.0
    %138 = vmatpush2.msra.mxu0 0.0
    %139 = vmatprep.subr.mxu0 0.0
    %140 = vmatpush2.msra.mxu0 0.0
    %141 = vmatprep.subr.mxu0 0.0
    %142 = vmatpush2.msra.mxu0 0.0
    %143 = vmatprep.subr.mxu0 0.0
    %144 = vmatpush2.msra.mxu0 0.0
    %145 = vmatprep.subr.mxu0 0.0
    %146 = vmatpush2.msra.mxu0 0.0
    %147 = vmatprep.subr.mxu0 0.0
    %148 = vmatpush2.msra.mxu0 0.0
    %149 = vmatprep.subr.mxu0 0.0
    %150 = vmatpush2.msra.mxu0 0.0
    %151 = vmatprep.subr.mxu0 0.0
    %152 = vmatpush2.msra.mxu0 0.0
    %153 = vmatprep.subr.mxu0 0.0
    %154 = vmatpush2.msra.mxu0 0.0
    %155 = vmatprep.subr.mxu0 0.0
    %156 = vmatpush2.msra.mxu0 0.0
    %157 = vmatprep.subr.mxu0 0.0
    %158 = vmatpush2.msra.mxu0 0.0
    %159 = vmatprep.mubr.f32.mxu0 0.0
    %160 = vmatmul.mubr.f32.gmra.mxu0 %v93
    %v161 = vpop.f32.mrf.mxu0
    %v162 = vadd.f32 0.0, %v161
    %v163 = vpop.f32.mrf.mxu0
    %v164 = vadd.f32 0.0, %v163
    %165 = vdwg.mxu0
    %v166 = vld [vmem:[#allocation2] sm:$0xff]
    %v167 = vld [vmem:[#allocation2 + $0x8] sm:$0xff]
    %v168 = vld [vmem:[#allocation2 + $0x10] sm:$0xff]
    %v169 = vld [vmem:[#allocation2 + $0x18] sm:$0xff]
    %v170 = vld [vmem:[#allocation2 + $0x20] sm:$0xff]
    %v171 = vld [vmem:[#allocation2 + $0x28] sm:$0xff]
    %v172 = vld [vmem:[#allocation2 + $0x30] sm:$0xff]
    %v173 = vld [vmem:[#allocation2 + $0x38] sm:$0xff]
    %v174 = vld [vmem:[#allocation2 + $0x40] sm:$0xff]
    %v175 = vld [vmem:[#allocation2 + $0x48] sm:$0xff]
    %v176 = vld [vmem:[#allocation2 + $0x50] sm:$0xff]
    %v177 = vld [vmem:[#allocation2 + $0x58] sm:$0xff]
    %v178 = vld [vmem:[#allocation2 + $0x60] sm:$0xff]
    %v179 = vld [vmem:[#allocation2 + $0x68] sm:$0xff]
    %v180 = vld [vmem:[#allocation2 + $0x70] sm:$0xff]
    %v181 = vld [vmem:[#allocation2 + $0x78] sm:$0xff]
    %v182 = vld [vmem:[#allocation2 + $0x80] sm:$0xff]
    %v183 = vld [vmem:[#allocation2 + $0x88] sm:$0xff]
    %v184 = vld [vmem:[#allocation2 + $0x90] sm:$0xff]
    %v185 = vld [vmem:[#allocation2 + $0x98] sm:$0xff]
    %v186 = vld [vmem:[#allocation2 + $0xa0] sm:$0xff]
    %v187 = vld [vmem:[#allocation2 + $0xa8] sm:$0xff]
    %v188 = vld [vmem:[#allocation2 + $0xb0] sm:$0xff]
    %v189 = vld [vmem:[#allocation2 + $0xb8] sm:$0xff]
    %v190 = vld [vmem:[#allocation2 + $0xc0] sm:$0xff]
    %v191 = vld [vmem:[#allocation2 + $0xc8] sm:$0xff]
    %v192 = vld [vmem:[#allocation2 + $0xd0] sm:$0xff]
    %v193 = vld [vmem:[#allocation2 + $0xd8] sm:$0xff]
    %v194 = vld [vmem:[#allocation2 + $0xe0] sm:$0xff]
    %v195 = vld [vmem:[#allocation2 + $0xe8] sm:$0xff]
    %v196 = vld [vmem:[#allocation2 + $0xf0] sm:$0xff]
    %v197 = vld [vmem:[#allocation2 + $0xf8] sm:$0xff]
    %v198 = vld [vmem:[#allocation2 + $0x100] sm:$0xff]
    %v199 = vld [vmem:[#allocation2 + $0x108] sm:$0xff]
    %v200 = vld [vmem:[#allocation2 + $0x110] sm:$0xff]
    %v201 = vld [vmem:[#allocation2 + $0x118] sm:$0xff]
    %v202 = vld [vmem:[#allocation2 + $0x120] sm:$0xff]
    %v203 = vld [vmem:[#allocation2 + $0x128] sm:$0xff]
    %v204 = vld [vmem:[#allocation2 + $0x130] sm:$0xff]
    %v205 = vld [vmem:[#allocation2 + $0x138] sm:$0xff]
    %v206 = vld [vmem:[#allocation2 + $0x140] sm:$0xff]
    %v207 = vld [vmem:[#allocation2 + $0x148] sm:$0xff]
    %v208 = vld [vmem:[#allocation2 + $0x150] sm:$0xff]
    %v209 = vld [vmem:[#allocation2 + $0x158] sm:$0xff]
    %v210 = vld [vmem:[#allocation2 + $0x160] sm:$0xff]
    %v211 = vld [vmem:[#allocation2 + $0x168] sm:$0xff]
    %v212 = vld [vmem:[#allocation2 + $0x170] sm:$0xff]
    %v213 = vld [vmem:[#allocation2 + $0x178] sm:$0xff]
    %v214 = vld [vmem:[#allocation2 + $0x180] sm:$0xff]
    %v215 = vld [vmem:[#allocation2 + $0x188] sm:$0xff]
    %v216 = vld [vmem:[#allocation2 + $0x190] sm:$0xff]
    %v217 = vld [vmem:[#allocation2 + $0x198] sm:$0xff]
    %v218 = vld [vmem:[#allocation2 + $0x1a0] sm:$0xff]
    %v219 = vld [vmem:[#allocation2 + $0x1a8] sm:$0xff]
    %v220 = vld [vmem:[#allocation2 + $0x1b0] sm:$0xff]
    %v221 = vld [vmem:[#allocation2 + $0x1b8] sm:$0xff]
    %v222 = vld [vmem:[#allocation2 + $0x1c0] sm:$0xff]
    %v223 = vld [vmem:[#allocation2 + $0x1c8] sm:$0xff]
    %v224 = vld [vmem:[#allocation2 + $0x1d0] sm:$0xff]
    %v225 = vld [vmem:[#allocation2 + $0x1d8] sm:$0xff]
    %vm226 = vcmask 916480
    %v228 = vsel %vm226, %v164, 0
    %230 = vmatprep.subr.mxu0 %v197
    %231 = vmatpush1.msra.mxu0 %v196
    %232 = vmatprep.subr.mxu0 %v195
    %233 = vmatpush1.msra.mxu0 %v194
    %234 = vmatprep.subr.mxu0 %v193
    %235 = vmatpush1.msra.mxu0 %v192
    %236 = vmatprep.subr.mxu0 %v191
    %237 = vmatpush1.msra.mxu0 %v190
    %238 = vmatprep.subr.mxu0 %v189
    %239 = vmatpush1.msra.mxu0 %v188
    %240 = vmatprep.subr.mxu0 %v187
    %241 = vmatpush1.msra.mxu0 %v186
    %242 = vmatprep.subr.mxu0 %v185
    %243 = vmatpush1.msra.mxu0 %v184
    %244 = vmatprep.subr.mxu0 %v183
    %245 = vmatpush1.msra.mxu0 %v182
    %246 = vmatprep.subr.mxu0 %v181
    %247 = vmatpush1.msra.mxu0 %v180
    %248 = vmatprep.subr.mxu0 %v179
    %249 = vmatpush1.msra.mxu0 %v178
    %250 = vmatprep.subr.mxu0 %v177
    %251 = vmatpush1.msra.mxu0 %v176
    %252 = vmatprep.subr.mxu0 %v175
    %253 = vmatpush1.msra.mxu0 %v174
    %254 = vmatprep.subr.mxu0 %v173
    %255 = vmatpush1.msra.mxu0 %v172
    %256 = vmatprep.subr.mxu0 %v171
    %257 = vmatpush1.msra.mxu0 %v170
    %258 = vmatprep.subr.mxu0 %v169
    %259 = vmatpush1.msra.mxu0 %v168
    %260 = vmatprep.subr.mxu0 %v167
    %261 = vmatpush1.msra.mxu0 %v166
    %262 = vmatprep.subr.mxu0 0.0
    %263 = vmatpush2.msra.mxu0 0.0
    %264 = vmatprep.subr.mxu0 0.0
    %265 = vmatpush2.msra.mxu0 0.0
    %266 = vmatprep.subr.mxu0 %v225
    %267 = vmatpush2.msra.mxu0 %v224
    %268 = vmatprep.subr.mxu0 %v223
    %269 = vmatpush2.msra.mxu0 %v222
    %270 = vmatprep.subr.mxu0 %v221
    %271 = vmatpush2.msra.mxu0 %v220
    %272 = vmatprep.subr.mxu0 %v219
    %273 = vmatpush2.msra.mxu0 %v218
    %274 = vmatprep.subr.mxu0 %v217
    %275 = vmatpush2.msra.mxu0 %v216
    %276 = vmatprep.subr.mxu0 %v215
    %277 = vmatpush2.msra.mxu0 %v214
    %278 = vmatprep.subr.mxu0 %v213
    %279 = vmatpush2.msra.mxu0 %v212
    %280 = vmatprep.subr.mxu0 %v211
    %281 = vmatpush2.msra.mxu0 %v210
    %282 = vmatprep.subr.mxu0 %v209
    %283 = vmatpush2.msra.mxu0 %v208
    %284 = vmatprep.subr.mxu0 %v207
    %285 = vmatpush2.msra.mxu0 %v206
    %286 = vmatprep.subr.mxu0 %v205
    %287 = vmatpush2.msra.mxu0 %v204
    %288 = vmatprep.subr.mxu0 %v203
    %289 = vmatpush2.msra.mxu0 %v202
    %290 = vmatprep.subr.mxu0 %v201
    %291 = vmatpush2.msra.mxu0 %v200
    %292 = vmatprep.subr.mxu0 %v199
    %293 = vmatpush2.msra.mxu0 %v198
    %294 = vmatprep.mubr.f32.mxu0 %v228
    %295 = vmatmul.mubr.f32.gmra.mxu0 %v162
    %v296 = vpop.f32.mrf.mxu0
    %v297 = vadd.f32 0.0, %v296
    %v298 = vpop.f32.mrf.mxu0
    %v299 = vadd.f32 0.0, %v298
    %300 = vdwg.mxu0
    %v301 = vld [vmem:[#allocation5] sm:$0xff]
    %v302 = vld [vmem:[#allocation5 + $0x8] sm:$0xff]
    %v303 = vld [vmem:[#allocation5 + $0x10] sm:$0xff]
    %v304 = vld [vmem:[#allocation5 + $0x18] sm:$0xff]
    %v305 = vld [vmem:[#allocation5 + $0x20] sm:$0xff]
    %v306 = vld [vmem:[#allocation5 + $0x28] sm:$0xff]
    %v307 = vld [vmem:[#allocation5 + $0x30] sm:$0xff]
    %v308 = vld [vmem:[#allocation5 + $0x38] sm:$0xff]
    %v309 = vld [vmem:[#allocation5 + $0x40] sm:$0xff]
    %v310 = vld [vmem:[#allocation5 + $0x48] sm:$0xff]
    %v311 = vld [vmem:[#allocation5 + $0x50] sm:$0xff]
    %v312 = vld [vmem:[#allocation5 + $0x58] sm:$0xff]
    %v313 = vld [vmem:[#allocation5 + $0x60] sm:$0xff]
    %v314 = vld [vmem:[#allocation5 + $0x68] sm:$0xff]
    %v315 = vld [vmem:[#allocation5 + $0x70] sm:$0xff]
    %v316 = vld [vmem:[#allocation5 + $0x78] sm:$0xff]
    %v317 = vld [vmem:[#allocation5 + $0x80] sm:$0xff]
    %v318 = vld [vmem:[#allocation5 + $0x88] sm:$0xff]
    %v319 = vld [vmem:[#allocation5 + $0x90] sm:$0xff]
    %v320 = vld [vmem:[#allocation5 + $0x98] sm:$0xff]
    %v321 = vld [vmem:[#allocation5 + $0xa0] sm:$0xff]
    %v322 = vld [vmem:[#allocation5 + $0xa8] sm:$0xff]
    %v323 = vld [vmem:[#allocation5 + $0xb0] sm:$0xff]
    %v324 = vld [vmem:[#allocation5 + $0xb8] sm:$0xff]
    %v325 = vld [vmem:[#allocation5 + $0xc0] sm:$0xff]
    %v326 = vld [vmem:[#allocation5 + $0xc8] sm:$0xff]
    %v327 = vld [vmem:[#allocation5 + $0xd0] sm:$0xff]
    %v328 = vld [vmem:[#allocation5 + $0xd8] sm:$0xff]
    %v329 = vld [vmem:[#allocation5 + $0xe0] sm:$0xff]
    %v330 = vld [vmem:[#allocation5 + $0xe8] sm:$0xff]
    %v331 = vld [vmem:[#allocation5 + $0xf0] sm:$0xff]
    %v332 = vld [vmem:[#allocation5 + $0xf8] sm:$0xff]
    %v333 = vld [vmem:[#allocation5 + $0x100] sm:$0xff]
    %v334 = vld [vmem:[#allocation5 + $0x108] sm:$0xff]
    %v335 = vld [vmem:[#allocation5 + $0x110] sm:$0xff]
    %v336 = vld [vmem:[#allocation5 + $0x118] sm:$0xff]
    %v337 = vld [vmem:[#allocation5 + $0x120] sm:$0xff]
    %v338 = vld [vmem:[#allocation5 + $0x128] sm:$0xff]
    %v339 = vld [vmem:[#allocation5 + $0x130] sm:$0xff]
    %v340 = vld [vmem:[#allocation5 + $0x138] sm:$0xff]
    %v341 = vld [vmem:[#allocation5 + $0x140] sm:$0xff]
    %v342 = vld [vmem:[#allocation5 + $0x148] sm:$0xff]
    %v343 = vld [vmem:[#allocation5 + $0x150] sm:$0xff]
    %v344 = vld [vmem:[#allocation5 + $0x158] sm:$0xff]
    %v345 = vld [vmem:[#allocation5 + $0x160] sm:$0xff]
    %v346 = vld [vmem:[#allocation5 + $0x168] sm:$0xff]
    %v347 = vld [vmem:[#allocation5 + $0x170] sm:$0xff]
    %v348 = vld [vmem:[#allocation5 + $0x178] sm:$0xff]
    %v349 = vld [vmem:[#allocation5 + $0x180] sm:$0xff]
    %v350 = vld [vmem:[#allocation5 + $0x188] sm:$0xff]
    %v351 = vld [vmem:[#allocation5 + $0x190] sm:$0xff]
    %v352 = vld [vmem:[#allocation5 + $0x198] sm:$0xff]
    %v353 = vld [vmem:[#allocation5 + $0x1a0] sm:$0xff]
    %v354 = vld [vmem:[#allocation5 + $0x1a8] sm:$0xff]
    %v355 = vld [vmem:[#allocation5 + $0x1b0] sm:$0xff]
    %v356 = vld [vmem:[#allocation5 + $0x1b8] sm:$0xff]
    %v357 = vld [vmem:[#allocation5 + $0x1c0] sm:$0xff]
    %v358 = vld [vmem:[#allocation5 + $0x1c8] sm:$0xff]
    %v359 = vld [vmem:[#allocation5 + $0x1d0] sm:$0xff]
    %v360 = vld [vmem:[#allocation5 + $0x1d8] sm:$0xff]
    %v362 = vsel %vm226, %v299, 0
    %364 = vmatprep.subr.mxu0 %v332
    %365 = vmatpush1.msra.mxu0 %v331
    %366 = vmatprep.subr.mxu0 %v330
    %367 = vmatpush1.msra.mxu0 %v329
    %368 = vmatprep.subr.mxu0 %v328
    %369 = vmatpush1.msra.mxu0 %v327
    %370 = vmatprep.subr.mxu0 %v326
    %371 = vmatpush1.msra.mxu0 %v325
    %372 = vmatprep.subr.mxu0 %v324
    %373 = vmatpush1.msra.mxu0 %v323
    %374 = vmatprep.subr.mxu0 %v322
    %375 = vmatpush1.msra.mxu0 %v321
    %376 = vmatprep.subr.mxu0 %v320
    %377 = vmatpush1.msra.mxu0 %v319
    %378 = vmatprep.subr.mxu0 %v318
    %379 = vmatpush1.msra.mxu0 %v317
    %380 = vmatprep.subr.mxu0 %v316
    %381 = vmatpush1.msra.mxu0 %v315
    %382 = vmatprep.subr.mxu0 %v314
    %383 = vmatpush1.msra.mxu0 %v313
    %384 = vmatprep.subr.mxu0 %v312
    %385 = vmatpush1.msra.mxu0 %v311
    %386 = vmatprep.subr.mxu0 %v310
    %387 = vmatpush1.msra.mxu0 %v309
    %388 = vmatprep.subr.mxu0 %v308
    %389 = vmatpush1.msra.mxu0 %v307
    %390 = vmatprep.subr.mxu0 %v306
    %391 = vmatpush1.msra.mxu0 %v305
    %392 = vmatprep.subr.mxu0 %v304
    %393 = vmatpush1.msra.mxu0 %v303
    %394 = vmatprep.subr.mxu0 %v302
    %395 = vmatpush1.msra.mxu0 %v301
    %396 = vmatprep.subr.mxu0 0.0
    %397 = vmatpush2.msra.mxu0 0.0
    %398 = vmatprep.subr.mxu0 0.0
    %399 = vmatpush2.msra.mxu0 0.0
    %400 = vmatprep.subr.mxu0 %v360
    %401 = vmatpush2.msra.mxu0 %v359
    %402 = vmatprep.subr.mxu0 %v358
    %403 = vmatpush2.msra.mxu0 %v357
    %404 = vmatprep.subr.mxu0 %v356
    %405 = vmatpush2.msra.mxu0 %v355
    %406 = vmatprep.subr.mxu0 %v354
    %407 = vmatpush2.msra.mxu0 %v353
    %408 = vmatprep.subr.mxu0 %v352
    %409 = vmatpush2.msra.mxu0 %v351
    %410 = vmatprep.subr.mxu0 %v350
    %411 = vmatpush2.msra.mxu0 %v349
    %412 = vmatprep.subr.mxu0 %v348
    %413 = vmatpush2.msra.mxu0 %v347
    %414 = vmatprep.subr.mxu0 %v346
    %415 = vmatpush2.msra.mxu0 %v345
    %416 = vmatprep.subr.mxu0 %v344
    %417 = vmatpush2.msra.mxu0 %v343
    %418 = vmatprep.subr.mxu0 %v342
    %419 = vmatpush2.msra.mxu0 %v341
    %420 = vmatprep.subr.mxu0 %v340
    %421 = vmatpush2.msra.mxu0 %v339
    %422 = vmatprep.subr.mxu0 %v338
    %423 = vmatpush2.msra.mxu0 %v337
    %424 = vmatprep.subr.mxu0 %v336
    %425 = vmatpush2.msra.mxu0 %v335
    %426 = vmatprep.subr.mxu0 %v334
    %427 = vmatpush2.msra.mxu0 %v333
    %428 = vmatprep.mubr.f32.mxu0 %v362
    %429 = vmatmul.mubr.f32.gmra.mxu0 %v297
    %v430 = vpop.f32.mrf.mxu0
    %v431 = vadd.f32 0.0, %v430
    %v432 = vpop.f32.mrf.mxu0
    %v433 = vadd.f32 0.0, %v432
    %434 = vdwg.mxu0
    %v435 = vld [vmem:[#allocation7] sm:$0xff]
    %v436 = vld [vmem:[#allocation7 + $0x8] sm:$0xff]
    %v437 = vld [vmem:[#allocation7 + $0x10] sm:$0xff]
    %v438 = vld [vmem:[#allocation7 + $0x18] sm:$0xff]
    %v439 = vld [vmem:[#allocation7 + $0x20] sm:$0xff]
    %v440 = vld [vmem:[#allocation7 + $0x28] sm:$0xff]
    %v441 = vld [vmem:[#allocation7 + $0x30] sm:$0xff]
    %v442 = vld [vmem:[#allocation7 + $0x38] sm:$0xff]
    %v443 = vld [vmem:[#allocation7 + $0x40] sm:$0xff]
    %v444 = vld [vmem:[#allocation7 + $0x48] sm:$0xff]
    %v445 = vld [vmem:[#allocation7 + $0x50] sm:$0xff]
    %v446 = vld [vmem:[#allocation7 + $0x58] sm:$0xff]
    %v447 = vld [vmem:[#allocation7 + $0x60] sm:$0xff]
    %v448 = vld [vmem:[#allocation7 + $0x68] sm:$0xff]
    %v449 = vld [vmem:[#allocation7 + $0x70] sm:$0xff]
    %v450 = vld [vmem:[#allocation7 + $0x78] sm:$0xff]
    %v451 = vld [vmem:[#allocation7 + $0x80] sm:$0xff]
    %v452 = vld [vmem:[#allocation7 + $0x88] sm:$0xff]
    %v453 = vld [vmem:[#allocation7 + $0x90] sm:$0xff]
    %v454 = vld [vmem:[#allocation7 + $0x98] sm:$0xff]
    %v455 = vld [vmem:[#allocation7 + $0xa0] sm:$0xff]
    %v456 = vld [vmem:[#allocation7 + $0xa8] sm:$0xff]
    %v457 = vld [vmem:[#allocation7 + $0xb0] sm:$0xff]
    %v458 = vld [vmem:[#allocation7 + $0xb8] sm:$0xff]
    %v459 = vld [vmem:[#allocation7 + $0xc0] sm:$0xff]
    %v460 = vld [vmem:[#allocation7 + $0xc8] sm:$0xff]
    %v461 = vld [vmem:[#allocation7 + $0xd0] sm:$0xff]
    %v462 = vld [vmem:[#allocation7 + $0xd8] sm:$0xff]
    %v463 = vld [vmem:[#allocation7 + $0xe0] sm:$0xff]
    %v464 = vld [vmem:[#allocation7 + $0xe8] sm:$0xff]
    %v465 = vld [vmem:[#allocation7 + $0xf0] sm:$0xff]
    %v466 = vld [vmem:[#allocation7 + $0xf8] sm:$0xff]
    %v467 = vld [vmem:[#allocation7 + $0x100] sm:$0xff]
    %v468 = vld [vmem:[#allocation7 + $0x108] sm:$0xff]
    %v469 = vld [vmem:[#allocation7 + $0x110] sm:$0xff]
    %v470 = vld [vmem:[#allocation7 + $0x118] sm:$0xff]
    %v471 = vld [vmem:[#allocation7 + $0x120] sm:$0xff]
    %v472 = vld [vmem:[#allocation7 + $0x128] sm:$0xff]
    %v473 = vld [vmem:[#allocation7 + $0x130] sm:$0xff]
    %v474 = vld [vmem:[#allocation7 + $0x138] sm:$0xff]
    %v475 = vld [vmem:[#allocation7 + $0x140] sm:$0xff]
    %v476 = vld [vmem:[#allocation7 + $0x148] sm:$0xff]
    %v477 = vld [vmem:[#allocation7 + $0x150] sm:$0xff]
    %v478 = vld [vmem:[#allocation7 + $0x158] sm:$0xff]
    %v479 = vld [vmem:[#allocation7 + $0x160] sm:$0xff]
    %v480 = vld [vmem:[#allocation7 + $0x168] sm:$0xff]
    %v481 = vld [vmem:[#allocation7 + $0x170] sm:$0xff]
    %v482 = vld [vmem:[#allocation7 + $0x178] sm:$0xff]
    %v483 = vld [vmem:[#allocation7 + $0x180] sm:$0xff]
    %v484 = vld [vmem:[#allocation7 + $0x188] sm:$0xff]
    %v485 = vld [vmem:[#allocation7 + $0x190] sm:$0xff]
    %v486 = vld [vmem:[#allocation7 + $0x198] sm:$0xff]
    %v487 = vld [vmem:[#allocation7 + $0x1a0] sm:$0xff]
    %v488 = vld [vmem:[#allocation7 + $0x1a8] sm:$0xff]
    %v489 = vld [vmem:[#allocation7 + $0x1b0] sm:$0xff]
    %v490 = vld [vmem:[#allocation7 + $0x1b8] sm:$0xff]
    %v491 = vld [vmem:[#allocation7 + $0x1c0] sm:$0xff]
    %v492 = vld [vmem:[#allocation7 + $0x1c8] sm:$0xff]
    %v493 = vld [vmem:[#allocation7 + $0x1d0] sm:$0xff]
    %v494 = vld [vmem:[#allocation7 + $0x1d8] sm:$0xff]
    %v496 = vsel %vm226, %v433, 0
    %498 = vmatprep.subr.mxu0 %v466
    %499 = vmatpush1.msra.mxu0 %v465
    %500 = vmatprep.subr.mxu0 %v464
    %501 = vmatpush1.msra.mxu0 %v463
    %502 = vmatprep.subr.mxu0 %v462
    %503 = vmatpush1.msra.mxu0 %v461
    %504 = vmatprep.subr.mxu0 %v460
    %505 = vmatpush1.msra.mxu0 %v459
    %506 = vmatprep.subr.mxu0 %v458
    %507 = vmatpush1.msra.mxu0 %v457
    %508 = vmatprep.subr.mxu0 %v456
    %509 = vmatpush1.msra.mxu0 %v455
    %510 = vmatprep.subr.mxu0 %v454
    %511 = vmatpush1.msra.mxu0 %v453
    %512 = vmatprep.subr.mxu0 %v452
    %513 = vmatpush1.msra.mxu0 %v451
    %514 = vmatprep.subr.mxu0 %v450
    %515 = vmatpush1.msra.mxu0 %v449
    %516 = vmatprep.subr.mxu0 %v448
    %517 = vmatpush1.msra.mxu0 %v447
    %518 = vmatprep.subr.mxu0 %v446
    %519 = vmatpush1.msra.mxu0 %v445
    %520 = vmatprep.subr.mxu0 %v444
    %521 = vmatpush1.msra.mxu0 %v443
    %522 = vmatprep.subr.mxu0 %v442
    %523 = vmatpush1.msra.mxu0 %v441
    %524 = vmatprep.subr.mxu0 %v440
    %525 = vmatpush1.msra.mxu0 %v439
    %526 = vmatprep.subr.mxu0 %v438
    %527 = vmatpush1.msra.mxu0 %v437
    %528 = vmatprep.subr.mxu0 %v436
    %529 = vmatpush1.msra.mxu0 %v435
    %530 = vmatprep.subr.mxu0 0.0
    %531 = vmatpush2.msra.mxu0 0.0
    %532 = vmatprep.subr.mxu0 0.0
    %533 = vmatpush2.msra.mxu0 0.0
    %534 = vmatprep.subr.mxu0 %v494
    %535 = vmatpush2.msra.mxu0 %v493
    %536 = vmatprep.subr.mxu0 %v492
    %537 = vmatpush2.msra.mxu0 %v491
    %538 = vmatprep.subr.mxu0 %v490
    %539 = vmatpush2.msra.mxu0 %v489
    %540 = vmatprep.subr.mxu0 %v488
    %541 = vmatpush2.msra.mxu0 %v487
    %542 = vmatprep.subr.mxu0 %v486
    %543 = vmatpush2.msra.mxu0 %v485
    %544 = vmatprep.subr.mxu0 %v484
    %545 = vmatpush2.msra.mxu0 %v483
    %546 = vmatprep.subr.mxu0 %v482
    %547 = vmatpush2.msra.mxu0 %v481
    %548 = vmatprep.subr.mxu0 %v480
    %549 = vmatpush2.msra.mxu0 %v479
    %550 = vmatprep.subr.mxu0 %v478
    %551 = vmatpush2.msra.mxu0 %v477
    %552 = vmatprep.subr.mxu0 %v476
    %553 = vmatpush2.msra.mxu0 %v475
    %554 = vmatprep.subr.mxu0 %v474
    %555 = vmatpush2.msra.mxu0 %v473
    %556 = vmatprep.subr.mxu0 %v472
    %557 = vmatpush2.msra.mxu0 %v471
    %558 = vmatprep.subr.mxu0 %v470
    %559 = vmatpush2.msra.mxu0 %v469
    %560 = vmatprep.subr.mxu0 %v468
    %561 = vmatpush2.msra.mxu0 %v467
    %562 = vmatprep.mubr.f32.mxu0 %v496
    %563 = vmatmul.mubr.f32.gmra.mxu0 %v431
    %v564 = vpop.f32.mrf.mxu0
    %v565 = vadd.f32 0.0, %v564
    %v566 = vpop.f32.mrf.mxu0
    %v567 = vadd.f32 0.0, %v566
    %568 = vdwg.mxu0
    %v569 = vld [vmem:[#allocation8] sm:$0xff]
    %v570 = vld [vmem:[#allocation8 + $0x8] sm:$0xff]
    %v571 = vld [vmem:[#allocation8 + $0x10] sm:$0xff]
    %v572 = vld [vmem:[#allocation8 + $0x18] sm:$0xff]
    %v573 = vld [vmem:[#allocation8 + $0x20] sm:$0xff]
    %v574 = vld [vmem:[#allocation8 + $0x28] sm:$0xff]
    %v575 = vld [vmem:[#allocation8 + $0x30] sm:$0xff]
    %v576 = vld [vmem:[#allocation8 + $0x38] sm:$0xff]
    %v577 = vld [vmem:[#allocation8 + $0x40] sm:$0xff]
    %v578 = vld [vmem:[#allocation8 + $0x48] sm:$0xff]
    %v579 = vld [vmem:[#allocation8 + $0x50] sm:$0xff]
    %v580 = vld [vmem:[#allocation8 + $0x58] sm:$0xff]
    %v581 = vld [vmem:[#allocation8 + $0x60] sm:$0xff]
    %v582 = vld [vmem:[#allocation8 + $0x68] sm:$0xff]
    %v583 = vld [vmem:[#allocation8 + $0x70] sm:$0xff]
    %v584 = vld [vmem:[#allocation8 + $0x78] sm:$0xff]
    %v585 = vld [vmem:[#allocation8 + $0x80] sm:$0xff]
    %v586 = vld [vmem:[#allocation8 + $0x88] sm:$0xff]
    %v587 = vld [vmem:[#allocation8 + $0x90] sm:$0xff]
    %v588 = vld [vmem:[#allocation8 + $0x98] sm:$0xff]
    %v589 = vld [vmem:[#allocation8 + $0xa0] sm:$0xff]
    %v590 = vld [vmem:[#allocation8 + $0xa8] sm:$0xff]
    %v591 = vld [vmem:[#allocation8 + $0xb0] sm:$0xff]
    %v592 = vld [vmem:[#allocation8 + $0xb8] sm:$0xff]
    %v593 = vld [vmem:[#allocation8 + $0xc0] sm:$0xff]
    %v594 = vld [vmem:[#allocation8 + $0xc8] sm:$0xff]
    %v595 = vld [vmem:[#allocation8 + $0xd0] sm:$0xff]
    %v596 = vld [vmem:[#allocation8 + $0xd8] sm:$0xff]
    %v597 = vld [vmem:[#allocation8 + $0xe0] sm:$0xff]
    %v598 = vld [vmem:[#allocation8 + $0xe8] sm:$0xff]
    %v599 = vld [vmem:[#allocation8 + $0xf0] sm:$0xff]
    %v600 = vld [vmem:[#allocation8 + $0xf8] sm:$0xff]
    %v601 = vld [vmem:[#allocation8 + $0x100] sm:$0xff]
    %v602 = vld [vmem:[#allocation8 + $0x108] sm:$0xff]
    %v603 = vld [vmem:[#allocation8 + $0x110] sm:$0xff]
    %v604 = vld [vmem:[#allocation8 + $0x118] sm:$0xff]
    %v605 = vld [vmem:[#allocation8 + $0x120] sm:$0xff]
    %v606 = vld [vmem:[#allocation8 + $0x128] sm:$0xff]
    %v607 = vld [vmem:[#allocation8 + $0x130] sm:$0xff]
    %v608 = vld [vmem:[#allocation8 + $0x138] sm:$0xff]
    %v609 = vld [vmem:[#allocation8 + $0x140] sm:$0xff]
    %v610 = vld [vmem:[#allocation8 + $0x148] sm:$0xff]
    %v611 = vld [vmem:[#allocation8 + $0x150] sm:$0xff]
    %v612 = vld [vmem:[#allocation8 + $0x158] sm:$0xff]
    %v613 = vld [vmem:[#allocation8 + $0x160] sm:$0xff]
    %v614 = vld [vmem:[#allocation8 + $0x168] sm:$0xff]
    %v615 = vld [vmem:[#allocation8 + $0x170] sm:$0xff]
    %v616 = vld [vmem:[#allocation8 + $0x178] sm:$0xff]
    %v617 = vld [vmem:[#allocation8 + $0x180] sm:$0xff]
    %v618 = vld [vmem:[#allocation8 + $0x188] sm:$0xff]
    %v619 = vld [vmem:[#allocation8 + $0x190] sm:$0xff]
    %v620 = vld [vmem:[#allocation8 + $0x198] sm:$0xff]
    %v621 = vld [vmem:[#allocation8 + $0x1a0] sm:$0xff]
    %v622 = vld [vmem:[#allocation8 + $0x1a8] sm:$0xff]
    %v623 = vld [vmem:[#allocation8 + $0x1b0] sm:$0xff]
    %v624 = vld [vmem:[#allocation8 + $0x1b8] sm:$0xff]
    %v625 = vld [vmem:[#allocation8 + $0x1c0] sm:$0xff]
    %v626 = vld [vmem:[#allocation8 + $0x1c8] sm:$0xff]
    %v627 = vld [vmem:[#allocation8 + $0x1d0] sm:$0xff]
    %v628 = vld [vmem:[#allocation8 + $0x1d8] sm:$0xff]
    %v630 = vsel %vm226, %v567, 0
    %632 = vmatprep.subr.mxu0 %v600
    %633 = vmatpush1.msra.mxu0 %v599
    %634 = vmatprep.subr.mxu0 %v598
    %635 = vmatpush1.msra.mxu0 %v597
    %636 = vmatprep.subr.mxu0 %v596
    %637 = vmatpush1.msra.mxu0 %v595
    %638 = vmatprep.subr.mxu0 %v594
    %639 = vmatpush1.msra.mxu0 %v593
    %640 = vmatprep.subr.mxu0 %v592
    %641 = vmatpush1.msra.mxu0 %v591
    %642 = vmatprep.subr.mxu0 %v590
    %643 = vmatpush1.msra.mxu0 %v589
    %644 = vmatprep.subr.mxu0 %v588
    %645 = vmatpush1.msra.mxu0 %v587
    %646 = vmatprep.subr.mxu0 %v586
    %647 = vmatpush1.msra.mxu0 %v585
    %648 = vmatprep.subr.mxu0 %v584
    %649 = vmatpush1.msra.mxu0 %v583
    %650 = vmatprep.subr.mxu0 %v582
    %651 = vmatpush1.msra.mxu0 %v581
    %652 = vmatprep.subr.mxu0 %v580
    %653 = vmatpush1.msra.mxu0 %v579
    %654 = vmatprep.subr.mxu0 %v578
    %655 = vmatpush1.msra.mxu0 %v577
    %656 = vmatprep.subr.mxu0 %v576
    %657 = vmatpush1.msra.mxu0 %v575
    %658 = vmatprep.subr.mxu0 %v574
    %659 = vmatpush1.msra.mxu0 %v573
    %660 = vmatprep.subr.mxu0 %v572
    %661 = vmatpush1.msra.mxu0 %v571
    %662 = vmatprep.subr.mxu0 %v570
    %663 = vmatpush1.msra.mxu0 %v569
    %664 = vmatprep.subr.mxu0 0.0
    %665 = vmatpush2.msra.mxu0 0.0
    %666 = vmatprep.subr.mxu0 0.0
    %667 = vmatpush2.msra.mxu0 0.0
    %668 = vmatprep.subr.mxu0 %v628
    %669 = vmatpush2.msra.mxu0 %v627
    %670 = vmatprep.subr.mxu0 %v626
    %671 = vmatpush2.msra.mxu0 %v625
    %672 = vmatprep.subr.mxu0 %v624
    %673 = vmatpush2.msra.mxu0 %v623
    %674 = vmatprep.subr.mxu0 %v622
    %675 = vmatpush2.msra.mxu0 %v621
    %676 = vmatprep.subr.mxu0 %v620
    %677 = vmatpush2.msra.mxu0 %v619
    %678 = vmatprep.subr.mxu0 %v618
    %679 = vmatpush2.msra.mxu0 %v617
    %680 = vmatprep.subr.mxu0 %v616
    %681 = vmatpush2.msra.mxu0 %v615
    %682 = vmatprep.subr.mxu0 %v614
    %683 = vmatpush2.msra.mxu0 %v613
    %684 = vmatprep.subr.mxu0 %v612
    %685 = vmatpush2.msra.mxu0 %v611
    %686 = vmatprep.subr.mxu0 %v610
    %687 = vmatpush2.msra.mxu0 %v609
    %688 = vmatprep.subr.mxu0 %v608
    %689 = vmatpush2.msra.mxu0 %v607
    %690 = vmatprep.subr.mxu0 %v606
    %691 = vmatpush2.msra.mxu0 %v605
    %692 = vmatprep.subr.mxu0 %v604
    %693 = vmatpush2.msra.mxu0 %v603
    %694 = vmatprep.subr.mxu0 %v602
    %695 = vmatpush2.msra.mxu0 %v601
    %696 = vmatprep.mubr.f32.mxu0 %v630
    %697 = vmatmul.mubr.f32.gmra.mxu0 %v565
    %v698 = vpop.f32.mrf.mxu0
    %v699 = vadd.f32 0.0, %v698
    %v700 = vpop.f32.mrf.mxu0
    %v701 = vadd.f32 0.0, %v700
    %702 = vdwg.mxu0
    %v703 = vld [vmem:[%s6] sm:$0xff]
    %v704 = vld [vmem:[%s6 + $0x8] sm:$0xff]
    %v705 = vld [vmem:[%s6 + $0x10] sm:$0xff]
    %v706 = vld [vmem:[%s6 + $0x18] sm:$0xff]
    %v707 = vld [vmem:[%s6 + $0x20] sm:$0xff]
    %v708 = vld [vmem:[%s6 + $0x28] sm:$0xff]
    %v709 = vld [vmem:[%s6 + $0x30] sm:$0xff]
    %v710 = vld [vmem:[%s6 + $0x38] sm:$0xff]
    %v711 = vld [vmem:[%s6 + $0x40] sm:$0xff]
    %v712 = vld [vmem:[%s6 + $0x48] sm:$0xff]
    %v713 = vld [vmem:[%s6 + $0x50] sm:$0xff]
    %v714 = vld [vmem:[%s6 + $0x58] sm:$0xff]
    %v715 = vld [vmem:[%s6 + $0x60] sm:$0xff]
    %v716 = vld [vmem:[%s6 + $0x68] sm:$0xff]
    %v717 = vld [vmem:[%s6 + $0x70] sm:$0xff]
    %v718 = vld [vmem:[%s6 + $0x78] sm:$0xff]
    %v719 = vld [vmem:[%s6 + $0x80] sm:$0xff]
    %v720 = vld [vmem:[%s6 + $0x88] sm:$0xff]
    %v721 = vld [vmem:[%s6 + $0x90] sm:$0xff]
    %v722 = vld [vmem:[%s6 + $0x98] sm:$0xff]
    %v723 = vld [vmem:[%s6 + $0xa0] sm:$0xff]
    %v724 = vld [vmem:[%s6 + $0xa8] sm:$0xff]
    %v725 = vld [vmem:[%s6 + $0xb0] sm:$0xff]
    %v726 = vld [vmem:[%s6 + $0xb8] sm:$0xff]
    %v727 = vld [vmem:[%s6 + $0xc0] sm:$0xff]
    %v728 = vld [vmem:[%s6 + $0xc8] sm:$0xff]
    %v729 = vld [vmem:[%s6 + $0xd0] sm:$0xff]
    %v730 = vld [vmem:[%s6 + $0xd8] sm:$0xff]
    %v731 = vld [vmem:[%s6 + $0xe0] sm:$0xff]
    %v732 = vld [vmem:[%s6 + $0xe8] sm:$0xff]
    %v734 = vsel %vm226, %v701, 0
    %736 = vmatprep.subr.mxu0 0.0
    %737 = vmatpush1.msra.mxu0 %v718
    %738 = vmatprep.subr.mxu0 0.0
    %739 = vmatpush1.msra.mxu0 %v717
    %740 = vmatprep.subr.mxu0 0.0
    %741 = vmatpush1.msra.mxu0 %v716
    %742 = vmatprep.subr.mxu0 0.0
    %743 = vmatpush1.msra.mxu0 %v715
    %744 = vmatprep.subr.mxu0 0.0
    %745 = vmatpush1.msra.mxu0 %v714
    %746 = vmatprep.subr.mxu0 0.0
    %747 = vmatpush1.msra.mxu0 %v713
    %748 = vmatprep.subr.mxu0 0.0
    %749 = vmatpush1.msra.mxu0 %v712
    %750 = vmatprep.subr.mxu0 0.0
    %751 = vmatpush1.msra.mxu0 %v711
    %752 = vmatprep.subr.mxu0 0.0
    %753 = vmatpush1.msra.mxu0 %v710
    %754 = vmatprep.subr.mxu0 0.0
    %755 = vmatpush1.msra.mxu0 %v709
    %756 = vmatprep.subr.mxu0 0.0
    %757 = vmatpush1.msra.mxu0 %v708
    %758 = vmatprep.subr.mxu0 0.0
    %759 = vmatpush1.msra.mxu0 %v707
    %760 = vmatprep.subr.mxu0 0.0
    %761 = vmatpush1.msra.mxu0 %v706
    %762 = vmatprep.subr.mxu0 0.0
    %763 = vmatpush1.msra.mxu0 %v705
    %764 = vmatprep.subr.mxu0 0.0
    %765 = vmatpush1.msra.mxu0 %v704
    %766 = vmatprep.subr.mxu0 0.0
    %767 = vmatpush1.msra.mxu0 %v703
    %768 = vmatprep.subr.mxu0 0.0
    %769 = vmatpush2.msra.mxu0 0.0
    %770 = vmatprep.subr.mxu0 0.0
    %771 = vmatpush2.msra.mxu0 0.0
    %772 = vmatprep.subr.mxu0 0.0
    %773 = vmatpush2.msra.mxu0 %v732
    %774 = vmatprep.subr.mxu0 0.0
    %775 = vmatpush2.msra.mxu0 %v731
    %776 = vmatprep.subr.mxu0 0.0
    %777 = vmatpush2.msra.mxu0 %v730
    %778 = vmatprep.subr.mxu0 0.0
    %779 = vmatpush2.msra.mxu0 %v729
    %780 = vmatprep.subr.mxu0 0.0
    %781 = vmatpush2.msra.mxu0 %v728
    %782 = vmatprep.subr.mxu0 0.0
    %783 = vmatpush2.msra.mxu0 %v727
    %784 = vmatprep.subr.mxu0 0.0
    %785 = vmatpush2.msra.mxu0 %v726
    %786 = vmatprep.subr.mxu0 0.0
    %787 = vmatpush2.msra.mxu0 %v725
    %788 = vmatprep.subr.mxu0 0.0
    %789 = vmatpush2.msra.mxu0 %v724
    %790 = vmatprep.subr.mxu0 0.0
    %791 = vmatpush2.msra.mxu0 %v723
    %792 = vmatprep.subr.mxu0 0.0
    %793 = vmatpush2.msra.mxu0 %v722
    %794 = vmatprep.subr.mxu0 0.0
    %795 = vmatpush2.msra.mxu0 %v721
    %796 = vmatprep.subr.mxu0 0.0
    %797 = vmatpush2.msra.mxu0 %v720
    %798 = vmatprep.subr.mxu0 0.0
    %799 = vmatpush2.msra.mxu0 %v719
    %800 = vmatprep.mubr.f32.mxu0 %v734
    %801 = vmatmul.mubr.f32.gmra.mxu0 %v699
    %v802 = vpop.f32.mrf.mxu0
    %v803 = vadd.f32 0.0, %v802
    %v804 = vpop.f32.mrf.mxu0
    %805 = vdwg.mxu0
    %vm806 = vcmask 130048
    %807 = vst.msk [vmem:[#allocation10] sm:$0xff] %vm806, %v803
    // Predicated region
    $region46: #{tpu_custom_call.1} parent=1 // pred_check
      _
    $region47: #{tpu_custom_call.1} parent=1 // pred_check_branch
      %809 = sbr.rel (0) target = $region49
    $region48: #{tpu_custom_call.1} parent=1 // pred_region
      %s811 = ssub.s32 128, 128
      %812 = vsyncadd [#allocation4], %s811
      %s814 = sshll.u32 [#allocation10], 4
      %s815 = int_to_ptr.vmem [resolvable:$true] %s814
      %817 = dma.vmem_to_hbm [thread:$0]  %s815, 128, %s7, [#allocation4]
    $region49: #{tpu_custom_call.1} parent=1 // pred_fallthru
      _
    // Predicated region
    $region50: #{tpu_custom_call.1} parent=1 // pred_check
      _
    $region51: #{tpu_custom_call.1} parent=1 // pred_check_branch
      %819 = sbr.rel (0) target = $region53
    $region52: #{tpu_custom_call.1} parent=1 // pred_region
      %820 = dma.done [#allocation4], 128
    $region53: #{tpu_custom_call.1} parent=1 // pred_fallthru
      _
    %821 = vsyncpa [#allocation3], 1
    %822 = vsyncpa [#allocation6], 1
    %823 = vsyncpa [#allocation9], 1
    %824 = vsyncpa [#allocation4], 1

</llo_original>
